<compile_context>
chip_gen: v6e
topology: v6e:2x2x1
jax: 0.10.0
libtpu: 0.0.40
codegen_flags: <defaults>
</compile_context>

<pallas_src>
import jax
import jax.numpy as jnp
from jax.experimental import pallas as pl
from jax.experimental.pallas import tpu as pltpu


_VMEM_BUDGET_BYTES = 24 * 1024 * 1024  # headroom under the ~32 MiB default scoped VMEM limit


def _round_up(n, m):
    return ((n + m - 1) // m) * m


def _choose_tile_b(batch, tile_b_max):
    """Batch tile: multiple of 16, <= tile_b_max, aiming for >=4 grid steps when possible."""
    if batch <= 16:
        return batch                      # full-extent block (always legal)
    t = _round_up(pl.cdiv(batch, 4), 16)  # ~4 steps -> >=2 per TensorCore on v7x megacore
    return max(16, min(tile_b_max, t))


def _vmem_bytes(tile_b, input_dim, hidden_dim, n_pad, x_itemsize, out_itemsize):
    """Approximate VMEM footprint: pipelined buffers + resident weights + kernel temporaries."""
    x_buf = 2 * tile_b * input_dim * x_itemsize              # double-buffered x tile
    o_buf = 2 * tile_b * n_pad * out_itemsize                # double-buffered out tile
    weights = (input_dim * hidden_dim                        # bf16, single-buffered
               + hidden_dim * hidden_dim
               + hidden_dim * n_pad) * 2
    biases = (2 * hidden_dim + n_pad) * 4                    # f32
    temps = (2 * tile_b * hidden_dim * (4 + 2)               # h1/h2: f32 + bf16 copies
             + tile_b * n_pad * 4)                           # f32 logits before final cast
    return x_buf + o_buf + weights + biases + temps


def _mlp_kernel(x_ref, w1_ref, b1_ref, w2_ref, b2_ref, w3_ref, b3_ref, o_ref):
    """Fused MLP: relu(relu(x @ W1 + b1) @ W2 + b2) @ W3 + b3 (f32 accumulation)."""
    x = x_ref[...].astype(jnp.bfloat16)                      # in-kernel cast: free VPU filler

    # Layer 1: Linear + ReLU   (Dropout = identity in eval mode)
    h1 = jnp.dot(x, w1_ref[...], preferred_element_type=jnp.float32) + b1_ref[...]
    h1 = jnp.maximum(h1, 0.0).astype(jnp.bfloat16)

    # Layer 2: Linear + ReLU   (Dropout = identity in eval mode)
    h2 = jnp.dot(h1, w2_ref[...], preferred_element_type=jnp.float32) + b2_ref[...]
    h2 = jnp.maximum(h2, 0.0).astype(jnp.bfloat16)

    # Layer 3: Linear (logits, lane-dense padded width)
    logits = jnp.dot(h2, w3_ref[...], preferred_element_type=jnp.float32) + b3_ref[...]
    o_ref[...] = logits.astype(o_ref.dtype)


def crop_type_classifier(x, params, *, tile_b_max=256, out_dtype=None):
    """Run the fused MLP Pallas kernel.

    x: (batch, input_dim) float32 (cast to bf16 inside the kernel)
    params: dict with w1 (in,hid), b1 (1,hid), w2 (hid,hid), b2 (1,hid),
            w3 (hid,ncls), b3 (1,ncls)   (f32; weights cast to bf16)
    returns: (batch, n_classes) logits in out_dtype (default: x.dtype)
    """
    batch, input_dim = x.shape
    hidden_dim = params["w1"].shape[1]
    n_classes = params["w3"].shape[1]
    out_dtype = x.dtype if out_dtype is None else out_dtype
    x_isz = jnp.dtype(x.dtype).itemsize
    out_isz = jnp.dtype(out_dtype).itemsize

    # ---- lane-dense output width ----
    n_pad = _round_up(max(n_classes, 128), 128)

    # ---- batch tiling: no batch padding, partial last block via cdiv grid ----
    tile_b = _choose_tile_b(batch, tile_b_max)
    while tile_b > 16 and _vmem_bytes(tile_b, input_dim, hidden_dim, n_pad,
                                      x_isz, out_isz) > _VMEM_BUDGET_BYTES:
        tile_b = max(16, _round_up(tile_b // 2, 16))
    grid = (pl.cdiv(batch, tile_b),)

    # ---- weight / bias prep (bf16 matmul operands, f32 biases; tiny vs x traffic) ----
    w1 = params["w1"].astype(jnp.bfloat16)
    w2 = params["w2"].astype(jnp.bfloat16)
    b1 = params["b1"].astype(jnp.float32).reshape(1, hidden_dim)
    b2 = params["b2"].astype(jnp.float32).reshape(1, hidden_dim)
    w3 = jnp.pad(params["w3"].astype(jnp.bfloat16), ((0, 0), (0, n_pad - n_classes)))
    b3 = jnp.pad(params["b3"].astype(jnp.float32).reshape(1, n_classes),
                 ((0, 0), (0, n_pad - n_classes)))

    # ---- cost estimate (helps XLA schedule around the custom call) ----
    flops = 2 * batch * (input_dim * hidden_dim + hidden_dim * hidden_dim + hidden_dim * n_pad)
    bytes_accessed = (
        batch * input_dim * x_isz
        + (w1.size + w2.size + w3.size) * 2
        + (b1.size + b2.size + b3.size) * 4
        + batch * n_pad * out_isz
    )

    def resident(a):
        # VMEM-resident param: constant index_map => DMA'd once; single buffer (no 2x VMEM).
        return pl.BlockSpec(a.shape, lambda i: (0,) * a.ndim, pipeline_mode=pl.Buffered(1))

    out = pl.pallas_call(
        _mlp_kernel,
        out_shape=jax.ShapeDtypeStruct((batch, n_pad), out_dtype),
        grid=grid,
        in_specs=[
            pl.BlockSpec((tile_b, input_dim), lambda i: (i, 0)),   # x: pipelined per batch tile
            resident(w1), resident(b1),
            resident(w2), resident(b2),
            resident(w3), resident(b3),
        ],
        out_specs=pl.BlockSpec((tile_b, n_pad), lambda i: (i, 0)),
        compiler_params=pltpu.CompilerParams(
            dimension_semantics=("parallel",),          # megacore sharding on v7x
        ),
        cost_estimate=pl.CostEstimate(
            flops=flops, transcendentals=0, bytes_accessed=bytes_accessed),
    )(x, w1, b1, w2, b2, w3, b3)

    return out[:, :n_classes]


def init_params(key, input_dim, hidden_dim, n_classes):
    """Deterministic parameter init (uniform, matching nn.Linear's fan-in scaling)."""
    ks = jax.random.split(key, 6)

    def linear_init(kw, kb, fan_in, fan_out):
        bound = 1.0 / jnp.sqrt(fan_in)
        w = jax.random.uniform(kw, (fan_in, fan_out), jnp.float32, -bound, bound)
        b = jax.random.uniform(kb, (1, fan_out), jnp.float32, -bound, bound)
        return w, b

    w1, b1 = linear_init(ks[0], ks[1], input_dim, hidden_dim)
    w2, b2 = linear_init(ks[2], ks[3], hidden_dim, hidden_dim)
    w3, b3 = linear_init(ks[4], ks[5], hidden_dim, n_classes)
    return dict(w1=w1, b1=b1, w2=w2, b2=b2, w3=w3, b3=b3)


def reference_mlp(x, p):
    """Reference with the same bf16-operand / f32-accumulate numerics as the kernel."""
    xb = x.astype(jnp.bfloat16)
    w1 = p["w1"].astype(jnp.bfloat16)
    w2 = p["w2"].astype(jnp.bfloat16)
    w3 = p["w3"].astype(jnp.bfloat16)
    h1 = jnp.maximum(jnp.dot(xb, w1, preferred_element_type=jnp.float32) + p["b1"], 0.0)
    h1 = h1.astype(jnp.bfloat16)
    h2 = jnp.maximum(jnp.dot(h1, w2, preferred_element_type=jnp.float32) + p["b2"], 0.0)
    h2 = h2.astype(jnp.bfloat16)
    return jnp.dot(h2, w3, preferred_element_type=jnp.float32) + p["b3"]


if __name__ == "__main__":
    # Small shapes consistent with the module's MLP forward.
    # batch=200 deliberately exercises the partial-last-block (cdiv grid, no batch padding).
    batch, input_dim, hidden_dim, n_classes = 200, 256, 128, 10

    key = jax.random.PRNGKey(0)
    k_x, k_p = jax.random.split(key)

    x = jax.random.normal(k_x, (batch, input_dim), jnp.float32)
    params = init_params(k_p, input_dim, hidden_dim, n_classes)

    out = crop_type_classifier(x, params)
    out = jax.block_until_ready(out)

    ref = reference_mlp(x, params)
    assert out.shape == (batch, n_classes)
    assert out.dtype == x.dtype
    assert jnp.allclose(out, ref.astype(out.dtype), atol=2e-2, rtol=2e-2), \
        "kernel mismatch vs reference"

    print("KERNEL_OK")
</pallas_src>

<mosaic_0001>
module attributes {stable_mosaic.version = 11 : i64} {
  func.func @_mlp_kernel(%arg0: i32, %arg1: memref<64x256xf32, #tpu.memory_space<vmem>>, %arg2: memref<256x128xbf16, #tpu.memory_space<vmem>>, %arg3: memref<1x128xf32, #tpu.memory_space<vmem>>, %arg4: memref<128x128xbf16, #tpu.memory_space<vmem>>, %arg5: memref<1x128xf32, #tpu.memory_space<vmem>>, %arg6: memref<128x128xbf16, #tpu.memory_space<vmem>>, %arg7: memref<1x128xf32, #tpu.memory_space<vmem>>, %arg8: memref<64x128xf32, #tpu.memory_space<vmem>>) attributes {dimension_semantics = [#tpu.dimension_semantics<parallel>], iteration_bounds = array<i64: 4>, scalar_prefetch = 0 : i64, scratch_operands = 0 : i64, tpu.core_type = #tpu.core_type<tc>, window_params = [{transform_indices = @transform_0, window_bounds = array<i64: 64, 256>}, {pipeline_mode = #tpu.pipeline_mode<synchronous>, transform_indices = @transform_1, window_bounds = array<i64: 256, 128>}, {pipeline_mode = #tpu.pipeline_mode<synchronous>, transform_indices = @transform_2, window_bounds = array<i64: 1, 128>}, {pipeline_mode = #tpu.pipeline_mode<synchronous>, transform_indices = @transform_3, window_bounds = array<i64: 128, 128>}, {pipeline_mode = #tpu.pipeline_mode<synchronous>, transform_indices = @transform_4, window_bounds = array<i64: 1, 128>}, {pipeline_mode = #tpu.pipeline_mode<synchronous>, transform_indices = @transform_5, window_bounds = array<i64: 128, 128>}, {pipeline_mode = #tpu.pipeline_mode<synchronous>, transform_indices = @transform_6, window_bounds = array<i64: 1, 128>}, {transform_indices = @transform_7, window_bounds = array<i64: 64, 128>}]} {
    %c0 = arith.constant 0 : index
    %c0_0 = arith.constant 0 : index
    %0 = vector.load %arg1[%c0, %c0_0] : memref<64x256xf32, #tpu.memory_space<vmem>>, vector<64x256xf32>
    %1 = arith.truncf %0 : vector<64x256xf32> to vector<64x256xbf16>
    %c0_1 = arith.constant 0 : index
    %c0_2 = arith.constant 0 : index
    %2 = vector.load %arg2[%c0_1, %c0_2] : memref<256x128xbf16, #tpu.memory_space<vmem>>, vector<256x128xbf16>
    %cst = arith.constant dense<0.000000e+00> : vector<64x128xf32>
    %3 = tpu.matmul %1, %2, %cst {dimension_numbers = #tpu.dot_dimension_numbers<[1], [0], [0], [1], [0, 0, 1, 1], [], []>} : vector<64x256xbf16>, vector<256x128xbf16>, vector<64x128xf32> -> vector<64x128xf32>
    %c0_3 = arith.constant 0 : index
    %c0_4 = arith.constant 0 : index
    %4 = vector.load %arg3[%c0_3, %c0_4] : memref<1x128xf32, #tpu.memory_space<vmem>>, vector<1x128xf32>
    %5 = vector.broadcast %4 : vector<1x128xf32> to vector<64x128xf32>
    %6 = arith.addf %3, %5 : vector<64x128xf32>
    %cst_5 = arith.constant 0.000000e+00 : f32
    %7 = vector.broadcast %cst_5 : f32 to vector<64x128xf32>
    %8 = arith.maximumf %6, %7 : vector<64x128xf32>
    %9 = arith.truncf %8 : vector<64x128xf32> to vector<64x128xbf16>
    %c0_6 = arith.constant 0 : index
    %c0_7 = arith.constant 0 : index
    %10 = vector.load %arg4[%c0_6, %c0_7] : memref<128x128xbf16, #tpu.memory_space<vmem>>, vector<128x128xbf16>
    %cst_8 = arith.constant dense<0.000000e+00> : vector<64x128xf32>
    %11 = tpu.matmul %9, %10, %cst_8 {dimension_numbers = #tpu.dot_dimension_numbers<[1], [0], [0], [1], [0, 0, 1, 1], [], []>} : vector<64x128xbf16>, vector<128x128xbf16>, vector<64x128xf32> -> vector<64x128xf32>
    %c0_9 = arith.constant 0 : index
    %c0_10 = arith.constant 0 : index
    %12 = vector.load %arg5[%c0_9, %c0_10] : memref<1x128xf32, #tpu.memory_space<vmem>>, vector<1x128xf32>
    %13 = vector.broadcast %12 : vector<1x128xf32> to vector<64x128xf32>
    %14 = arith.addf %11, %13 : vector<64x128xf32>
    %cst_11 = arith.constant 0.000000e+00 : f32
    %15 = vector.broadcast %cst_11 : f32 to vector<64x128xf32>
    %16 = arith.maximumf %14, %15 : vector<64x128xf32>
    %17 = arith.truncf %16 : vector<64x128xf32> to vector<64x128xbf16>
    %c0_12 = arith.constant 0 : index
    %c0_13 = arith.constant 0 : index
    %18 = vector.load %arg6[%c0_12, %c0_13] : memref<128x128xbf16, #tpu.memory_space<vmem>>, vector<128x128xbf16>
    %cst_14 = arith.constant dense<0.000000e+00> : vector<64x128xf32>
    %19 = tpu.matmul %17, %18, %cst_14 {dimension_numbers = #tpu.dot_dimension_numbers<[1], [0], [0], [1], [0, 0, 1, 1], [], []>} : vector<64x128xbf16>, vector<128x128xbf16>, vector<64x128xf32> -> vector<64x128xf32>
    %c0_15 = arith.constant 0 : index
    %c0_16 = arith.constant 0 : index
    %20 = vector.load %arg7[%c0_15, %c0_16] : memref<1x128xf32, #tpu.memory_space<vmem>>, vector<1x128xf32>
    %21 = vector.broadcast %20 : vector<1x128xf32> to vector<64x128xf32>
    %22 = arith.addf %19, %21 : vector<64x128xf32>
    %c0_17 = arith.constant 0 : index
    %c0_18 = arith.constant 0 : index
    %23 = vector.load %arg8[%c0_17, %c0_18] : memref<64x128xf32, #tpu.memory_space<vmem>>, vector<64x128xf32>
    tpu.vector_store %arg8[%c0_17, %c0_18], %22 {strides = array<i32>} : memref<64x128xf32, #tpu.memory_space<vmem>>, vector<64x128xf32>,
    return
  }
  func.func @transform_0(%arg0: i32) -> (i32, i32) {
    %c0_i32 = arith.constant 0 : i32
    %c0_i32_0 = arith.constant 0 : i32
    return %arg0, %c0_i32 : i32, i32
  }
  func.func @transform_1(%arg0: i32) -> (i32, i32) {
    %c0_i32 = arith.constant 0 : i32
    %c0_i32_0 = arith.constant 0 : i32
    %c0_i32_1 = arith.constant 0 : i32
    return %c0_i32, %c0_i32_0 : i32, i32
  }
  func.func @transform_2(%arg0: i32) -> (i32, i32) {
    %c0_i32 = arith.constant 0 : i32
    %c0_i32_0 = arith.constant 0 : i32
    %c0_i32_1 = arith.constant 0 : i32
    return %c0_i32, %c0_i32_0 : i32, i32
  }
  func.func @transform_3(%arg0: i32) -> (i32, i32) {
    %c0_i32 = arith.constant 0 : i32
    %c0_i32_0 = arith.constant 0 : i32
    %c0_i32_1 = arith.constant 0 : i32
    return %c0_i32, %c0_i32_0 : i32, i32
  }
  func.func @transform_4(%arg0: i32) -> (i32, i32) {
    %c0_i32 = arith.constant 0 : i32
    %c0_i32_0 = arith.constant 0 : i32
    %c0_i32_1 = arith.constant 0 : i32
    return %c0_i32, %c0_i32_0 : i32, i32
  }
  func.func @transform_5(%arg0: i32) -> (i32, i32) {
    %c0_i32 = arith.constant 0 : i32
    %c0_i32_0 = arith.constant 0 : i32
    %c0_i32_1 = arith.constant 0 : i32
    return %c0_i32, %c0_i32_0 : i32, i32
  }
  func.func @transform_6(%arg0: i32) -> (i32, i32) {
    %c0_i32 = arith.constant 0 : i32
    %c0_i32_0 = arith.constant 0 : i32
    %c0_i32_1 = arith.constant 0 : i32
    return %c0_i32, %c0_i32_0 : i32, i32
  }
  func.func @transform_7(%arg0: i32) -> (i32, i32) {
    %c0_i32 = arith.constant 0 : i32
    %c0_i32_0 = arith.constant 0 : i32
    return %arg0, %c0_i32 : i32, i32
  }
}

</mosaic_0001>

<llo_original>
// kernel: tpu_custom_call.1
$region0: #{tpu_custom_call.1}
  #allocation0 [shape = 'u32[]', space=smem, size = 0x4, offset = 0x4, fixed_abs, tag = 'smem constant byte address 0x4 - core index']
  #allocation1 [shape = 'u32[144,128]{1,0:T(1,128)}', space=vmem, size = 0x12000, scoped, tag = 'internal scratch']
  %s0 = inlined_call_operand.hbm [shape: f32[200,256], index: 0, kind: input, shape index: {}]
  %s1 = inlined_call_operand.hbm [shape: bf16[256,128], index: 1, kind: input, shape index: {}]
  %s2 = inlined_call_operand.vmem [shape: f32[1,128], index: 2, kind: input, shape index: {}]
  %s3 = inlined_call_operand.hbm [shape: bf16[128,128], index: 3, kind: input, shape index: {}]
  %s4 = inlined_call_operand.vmem [shape: f32[1,128], index: 4, kind: input, shape index: {}]
  %s5 = inlined_call_operand.hbm [shape: bf16[128,128], index: 5, kind: input, shape index: {}]
  %s6 = inlined_call_operand.vmem [shape: f32[1,128], index: 6, kind: input, shape index: {}]
  %s7 = inlined_call_operand.hbm [shape: f32[200,128], index: 7, kind: output, shape index: {}]
  %s8 = sld [smem:[#allocation0]]
  $region77: #{tpu_custom_call.1} parent=0
    _
  %s10 = ssub.s32 1, %s8
  %s11 = scalar_select 0, %s10, %s8
  $region1: #{tpu_custom_call.1} parent=0
    #allocation2 [shape = 'u8[131072]{0}', space=vmem, size = 0x20000, scoped, tag = 'input window, operand 0']
    #allocation3 [shape = 's32[2]{0}', space=sflag, size = 0x8, scoped, tag = 'scoped memory for tpu_custom_call.1']
    #allocation4 [shape = 's32[2]{0}', space=sflag, size = 0x8, scoped, tag = 'scoped memory for tpu_custom_call.1']
    #allocation5 [shape = 'u8[65536]{0}', space=vmem, size = 0x10000, scoped, tag = 'input window, operand 1, single buffered']
    #allocation6 [shape = 's32[1]{0}', space=sflag, size = 0x4, scoped, tag = 'scoped memory for tpu_custom_call.1']
    #allocation7 [shape = 'u8[32768]{0}', space=vmem, size = 0x8000, scoped, tag = 'input window, operand 3, single buffered']
    #allocation8 [shape = 'u8[32768]{0}', space=vmem, size = 0x8000, scoped, tag = 'input window, operand 5, single buffered']
    #allocation9 [shape = 's32[1]{0}', space=sflag, size = 0x4, scoped, tag = 'scoped memory for tpu_custom_call.1']
    #allocation10 [shape = 'u8[65536]{0}', space=vmem, size = 0x10000, scoped, tag = 'output window, operand 0']
    %12 = vsyncpa [#allocation3], 0
    %s13 = scalar_lea.sflag [#allocation3], 1
    %14 = vsyncpa %s13, 0
    %15 = vsyncpa [#allocation6], 0
    %16 = vsyncpa [#allocation9], 0
    %17 = vsyncpa [#allocation4], 0
    %s18 = scalar_lea.sflag [#allocation4], 1
    %19 = vsyncpa %s18, 0
    loop: start=0, step=1, limit=6
    $region2: #{tpu_custom_call.1} parent=1 // loop_pre_header
      _
    $region3: #{tpu_custom_call.1} parent=1 // loop_header
      %s21 = sphi 0, %s25
      %p22 = scmp.ge.s32.totalorder %s21, 6
      %s31 = sphi 0, %s33
      %s34 = sphi 0, %s31
      %s35 = sphi 0, %s34
      %s51 = sphi 0, %s35
      %s55 = sphi 0, %s55
      %s57 = sphi 0, %s55
      %s58 = sphi 0, %s57
      %s72 = sphi 0, %s58
      %s76 = sphi 0, %s76
      %s78 = sphi 0, %s76
      %s79 = sphi 0, %s78
      %s93 = sphi 0, %s79
      %s97 = sphi 0, %s97
      %s99 = sphi 0, %s97
      %s100 = sphi 0, %s99
      %s114 = sphi 0, %s100
      %s118 = sphi 0, %s118
      %s120 = sphi 0, %s118
      %s121 = sphi 0, %s120
      %s135 = sphi 0, %s121
      %s139 = sphi 0, %s139
      %s141 = sphi 0, %s139
      %s142 = sphi 0, %s141
      %s156 = sphi 0, %s142
      %s160 = sphi 0, %s160
      %s162 = sphi 0, %s160
      %s163 = sphi 0, %s162
      %s177 = sphi 0, %s163
      %s183 = sphi 0, %s185
      %s186 = sphi 0, %s183
      %s187 = sphi 0, %s186
      %s203 = sphi 0, %s187
    $region4: #{tpu_custom_call.1} parent=1 // loop_header_branch
      %24 = sbr.rel (%p22) target = $region8
    $region5: #{tpu_custom_call.1} parent=1 // loop_body
      %s26 = ssub.s32 %s21, 1
      %s27 = ssub.s32 %s21, 2
      %s28 = sadd.s32 %s21, 1
      %s29 = ssub.s32 %s21, %s28
      %p30 = scmp.eq.s32.totalorder %s29, 0
      %s32 = sadd.s32 %s31, 1
      %s33 = scalar_select %p30, %s31, %s32
      %p36 = pneg %p30
      %p37 = scmp.eq.s32.totalorder %s21, 3
      %p38 = por %p36, %p37
      %p39 = scmp.ne.s32.totalorder %s31, %s34
      %p40 = scmp.eq.s32.totalorder %s21, 0
      %p41 = por %p39, %p40
      %p42 = scmp.ne.s32.totalorder %s31, %s34
      %p43 = scmp.eq.s32.totalorder %s26, 3
      %p44 = por %p42, %p43
      %p45 = scmp.ne.s32.totalorder %s34, %s35
      %p46 = scmp.eq.s32.totalorder %s26, 0
      %p47 = por %p45, %p46
      %p48 = scmp.ne.s32.totalorder %s34, %s35
      %p49 = scmp.eq.s32.totalorder %s27, 3
      %p50 = por %p48, %p49
      %p52 = scmp.ne.s32.totalorder %s35, %s51
      %p53 = scmp.eq.s32.totalorder %s27, 0
      %p54 = por %p52, %p53
      %s56 = sadd.s32 %s55, 1
      %p59 = scmp.eq.s32.totalorder %s21, 3
      %p60 = scmp.ne.s32.totalorder %s55, %s57
      %p61 = scmp.eq.s32.totalorder %s21, 0
      %p62 = por %p60, %p61
      %p63 = scmp.ne.s32.totalorder %s55, %s57
      %p64 = scmp.eq.s32.totalorder %s26, 3
      %p65 = por %p63, %p64
      %p66 = scmp.ne.s32.totalorder %s57, %s58
      %p67 = scmp.eq.s32.totalorder %s26, 0
      %p68 = por %p66, %p67
      %p69 = scmp.ne.s32.totalorder %s57, %s58
      %p70 = scmp.eq.s32.totalorder %s27, 3
      %p71 = por %p69, %p70
      %p73 = scmp.ne.s32.totalorder %s58, %s72
      %p74 = scmp.eq.s32.totalorder %s27, 0
      %p75 = por %p73, %p74
      %s77 = sadd.s32 %s76, 1
      %p80 = scmp.eq.s32.totalorder %s21, 3
      %p81 = scmp.ne.s32.totalorder %s76, %s78
      %p82 = scmp.eq.s32.totalorder %s21, 0
      %p83 = por %p81, %p82
      %p84 = scmp.ne.s32.totalorder %s76, %s78
      %p85 = scmp.eq.s32.totalorder %s26, 3
      %p86 = por %p84, %p85
      %p87 = scmp.ne.s32.totalorder %s78, %s79
      %p88 = scmp.eq.s32.totalorder %s26, 0
      %p89 = por %p87, %p88
      %p90 = scmp.ne.s32.totalorder %s78, %s79
      %p91 = scmp.eq.s32.totalorder %s27, 3
      %p92 = por %p90, %p91
      %p94 = scmp.ne.s32.totalorder %s79, %s93
      %p95 = scmp.eq.s32.totalorder %s27, 0
      %p96 = por %p94, %p95
      %s98 = sadd.s32 %s97, 1
      %p101 = scmp.eq.s32.totalorder %s21, 3
      %p102 = scmp.ne.s32.totalorder %s97, %s99
      %p103 = scmp.eq.s32.totalorder %s21, 0
      %p104 = por %p102, %p103
      %p105 = scmp.ne.s32.totalorder %s97, %s99
      %p106 = scmp.eq.s32.totalorder %s26, 3
      %p107 = por %p105, %p106
      %p108 = scmp.ne.s32.totalorder %s99, %s100
      %p109 = scmp.eq.s32.totalorder %s26, 0
      %p110 = por %p108, %p109
      %p111 = scmp.ne.s32.totalorder %s99, %s100
      %p112 = scmp.eq.s32.totalorder %s27, 3
      %p113 = por %p111, %p112
      %p115 = scmp.ne.s32.totalorder %s100, %s114
      %p116 = scmp.eq.s32.totalorder %s27, 0
      %p117 = por %p115, %p116
      %s119 = sadd.s32 %s118, 1
      %p122 = scmp.eq.s32.totalorder %s21, 3
      %p123 = scmp.ne.s32.totalorder %s118, %s120
      %p124 = scmp.eq.s32.totalorder %s21, 0
      %p125 = por %p123, %p124
      %p126 = scmp.ne.s32.totalorder %s118, %s120
      %p127 = scmp.eq.s32.totalorder %s26, 3
      %p128 = por %p126, %p127
      %p129 = scmp.ne.s32.totalorder %s120, %s121
      %p130 = scmp.eq.s32.totalorder %s26, 0
      %p131 = por %p129, %p130
      %p132 = scmp.ne.s32.totalorder %s120, %s121
      %p133 = scmp.eq.s32.totalorder %s27, 3
      %p134 = por %p132, %p133
      %p136 = scmp.ne.s32.totalorder %s121, %s135
      %p137 = scmp.eq.s32.totalorder %s27, 0
      %p138 = por %p136, %p137
      %s140 = sadd.s32 %s139, 1
      %p143 = scmp.eq.s32.totalorder %s21, 3
      %p144 = scmp.ne.s32.totalorder %s139, %s141
      %p145 = scmp.eq.s32.totalorder %s21, 0
      %p146 = por %p144, %p145
      %p147 = scmp.ne.s32.totalorder %s139, %s141
      %p148 = scmp.eq.s32.totalorder %s26, 3
      %p149 = por %p147, %p148
      %p150 = scmp.ne.s32.totalorder %s141, %s142
      %p151 = scmp.eq.s32.totalorder %s26, 0
      %p152 = por %p150, %p151
      %p153 = scmp.ne.s32.totalorder %s141, %s142
      %p154 = scmp.eq.s32.totalorder %s27, 3
      %p155 = por %p153, %p154
      %p157 = scmp.ne.s32.totalorder %s142, %s156
      %p158 = scmp.eq.s32.totalorder %s27, 0
      %p159 = por %p157, %p158
      %s161 = sadd.s32 %s160, 1
      %p164 = scmp.eq.s32.totalorder %s21, 3
      %p165 = scmp.ne.s32.totalorder %s160, %s162
      %p166 = scmp.eq.s32.totalorder %s21, 0
      %p167 = por %p165, %p166
      %p168 = scmp.ne.s32.totalorder %s160, %s162
      %p169 = scmp.eq.s32.totalorder %s26, 3
      %p170 = por %p168, %p169
      %p171 = scmp.ne.s32.totalorder %s162, %s163
      %p172 = scmp.eq.s32.totalorder %s26, 0
      %p173 = por %p171, %p172
      %p174 = scmp.ne.s32.totalorder %s162, %s163
      %p175 = scmp.eq.s32.totalorder %s27, 3
      %p176 = por %p174, %p175
      %p178 = scmp.ne.s32.totalorder %s163, %s177
      %p179 = scmp.eq.s32.totalorder %s27, 0
      %p180 = por %p178, %p179
      %s181 = ssub.s32 %s21, %s28
      %p182 = scmp.eq.s32.totalorder %s181, 0
      %s184 = sadd.s32 %s183, 1
      %s185 = scalar_select %p182, %s183, %s184
      %p188 = pneg %p182
      %p189 = scmp.eq.s32.totalorder %s21, 3
      %p190 = por %p188, %p189
      %p191 = scmp.ne.s32.totalorder %s183, %s186
      %p192 = scmp.eq.s32.totalorder %s21, 0
      %p193 = por %p191, %p192
      %p194 = scmp.ne.s32.totalorder %s183, %s186
      %p195 = scmp.eq.s32.totalorder %s26, 3
      %p196 = por %p194, %p195
      %p197 = scmp.ne.s32.totalorder %s186, %s187
      %p198 = scmp.eq.s32.totalorder %s26, 0
      %p199 = por %p197, %p198
      %p200 = scmp.ne.s32.totalorder %s186, %s187
      %p201 = scmp.eq.s32.totalorder %s27, 3
      %p202 = por %p200, %p201
      %p204 = scmp.ne.s32.totalorder %s187, %s203
      %p205 = scmp.eq.s32.totalorder %s27, 0
      %p206 = por %p204, %p205
      %p207 = scmp.le.s32.totalorder 1, %s21
      %p208 = scmp.lt.s32.totalorder %s21, 5
      %p209 = pnand %p207, %p208
      %p210 = pneg %p209
      // Predicated region
      $region9: #{tpu_custom_call.1} parent=5 // pred_check
        _
      $region10: #{tpu_custom_call.1} parent=5 // pred_check_branch
        %212 = sbr.rel (%p209) target = $region12
      $region11: #{tpu_custom_call.1} parent=5 // pred_region
        %s213 = ssub.s32 %s21, 1
        // Predicated region
        $region13: #{tpu_custom_call.1} parent=11 // pred_check
          %p214 = pneg %p68
        $region14: #{tpu_custom_call.1} parent=11 // pred_check_branch
          %216 = sbr.rel (%p214) target = $region16
        $region15: #{tpu_custom_call.1} parent=11 // pred_region
          %s218 = ssub.s32 2048, 2048
          %219 = vsyncadd [#allocation6], %s218
          %s220 = sshll.u32 [#allocation5], 4
          %s221 = int_to_ptr.vmem [resolvable:$true] %s220
          %226 = dma.hbm_to_vmem [thread:$0]  %s1, 2048, %s221, [#allocation6], 64, 64, 4
        $region16: #{tpu_custom_call.1} parent=11 // pred_fallthru
          _
        // Predicated region
        $region17: #{tpu_custom_call.1} parent=11 // pred_check
          %p227 = pneg %p89
        $region18: #{tpu_custom_call.1} parent=11 // pred_check_branch
          %229 = sbr.rel (%p227) target = $region20
        $region19: #{tpu_custom_call.1} parent=11 // pred_region
          _
        $region20: #{tpu_custom_call.1} parent=11 // pred_fallthru
          _
        // Predicated region
        $region21: #{tpu_custom_call.1} parent=11 // pred_check
          %p230 = pneg %p110
        $region22: #{tpu_custom_call.1} parent=11 // pred_check_branch
          %232 = sbr.rel (%p230) target = $region24
        $region23: #{tpu_custom_call.1} parent=11 // pred_region
          %s234 = ssub.s32 1024, 1024
          %235 = vsyncadd [#allocation6], %s234
          %s236 = sshll.u32 [#allocation7], 4
          %s237 = int_to_ptr.vmem [resolvable:$true] %s236
          %242 = dma.hbm_to_vmem [thread:$0]  %s3, 1024, %s237, [#allocation6], 64, 64, 4
        $region24: #{tpu_custom_call.1} parent=11 // pred_fallthru
          _
        // Predicated region
        $region25: #{tpu_custom_call.1} parent=11 // pred_check
          %p243 = pneg %p131
        $region26: #{tpu_custom_call.1} parent=11 // pred_check_branch
          %245 = sbr.rel (%p243) target = $region28
        $region27: #{tpu_custom_call.1} parent=11 // pred_region
          _
        $region28: #{tpu_custom_call.1} parent=11 // pred_fallthru
          _
        // Predicated region
        $region29: #{tpu_custom_call.1} parent=11 // pred_check
          %p246 = pneg %p152
        $region30: #{tpu_custom_call.1} parent=11 // pred_check_branch
          %248 = sbr.rel (%p246) target = $region32
        $region31: #{tpu_custom_call.1} parent=11 // pred_region
          %s250 = ssub.s32 1024, 1024
          %251 = vsyncadd [#allocation9], %s250
          %s252 = sshll.u32 [#allocation8], 4
          %s253 = int_to_ptr.vmem [resolvable:$true] %s252
          %258 = dma.hbm_to_vmem [thread:$0]  %s5, 1024, %s253, [#allocation9], 64, 64, 4
        $region32: #{tpu_custom_call.1} parent=11 // pred_fallthru
          _
        // Predicated region
        $region33: #{tpu_custom_call.1} parent=11 // pred_check
          %p259 = pneg %p173
        $region34: #{tpu_custom_call.1} parent=11 // pred_check_branch
          %261 = sbr.rel (%p259) target = $region36
        $region35: #{tpu_custom_call.1} parent=11 // pred_region
          _
        $region36: #{tpu_custom_call.1} parent=11 // pred_fallthru
          _
      $region12: #{tpu_custom_call.1} parent=5 // pred_fallthru
        _
      %p262 = scmp.lt.s32.totalorder %s21, 4
      // Predicated region
      $region37: #{tpu_custom_call.1} parent=5 // pred_check
        %p263 = pneg %p262
      $region38: #{tpu_custom_call.1} parent=5 // pred_check_branch
        %265 = sbr.rel (%p263) target = $region40
      $region39: #{tpu_custom_call.1} parent=5 // pred_region
        // Predicated region
        $region41: #{tpu_custom_call.1} parent=39 // pred_check
          %p266 = pneg %p41
        $region42: #{tpu_custom_call.1} parent=39 // pred_check_branch
          %268 = sbr.rel (%p266) target = $region44
        $region43: #{tpu_custom_call.1} parent=39 // pred_region
          %s269 = sand.u32 %s31, 1
          %s270 = scalar_lea.sflag [#allocation3], %s269
          %s271 = sand.u32 %s31, 1
          %s272 = smul.addr %s271, 128
          %s273 = scalar_lea.vmem [#allocation2], %s272
          %s274 = smul.u32 8, %s21
          %s275 = ssub.s32 25, %s274
          %p276 = scmp.lt.s32.totalorder %s275, 8
          %s277 = scalar_select %p276, %s275, 8
          %s278 = smul.u32 128, %s277
          %s279 = smul.u32 %s278, 2
          %s281 = ssub.s32 2048, %s279
          %282 = vsyncadd %s270, %s281
          %p283 = scmp.ne.s32.totalorder 0, %s279
          %s284 = smul.addr %s274, 2
          %s285 = smul.addr %s284, 128
          %s286 = scalar_lea.hbm %s0, %s285
          %s287 = smul.u32 16, %s277
          %s288 = sshll.u32 %s273, 4
          %s289 = int_to_ptr.vmem [resolvable:$true] %s288
          %s290 = sshll.u32 %s287, 4
          %294 = dma.hbm_to_vmem [thread:$0]  (%p283), %s286, %s290, %s289, %s270, 256, 256, 16
        $region44: #{tpu_custom_call.1} parent=39 // pred_fallthru
          _
      $region40: #{tpu_custom_call.1} parent=5 // pred_fallthru
        _
      %p295 = scmp.le.s32.totalorder 1, %s21
      %p296 = scmp.lt.s32.totalorder %s21, 5
      %p297 = pnand %p295, %p296
      %p298 = pneg %p297
      // Predicated region
      $region45: #{tpu_custom_call.1} parent=5 // pred_check
        _
      $region46: #{tpu_custom_call.1} parent=5 // pred_check_branch
        %300 = sbr.rel (%p297) target = $region48
      $region47: #{tpu_custom_call.1} parent=5 // pred_region
        %s301 = ssub.s32 %s21, 1
        %s302 = sand.u32 %s34, 1
        %s303 = scalar_lea.sflag [#allocation3], %s302
        %s304 = sand.u32 %s34, 1
        %s305 = smul.addr %s304, 128
        %s306 = scalar_lea.vmem [#allocation2], %s305
        // Predicated region
        $region49: #{tpu_custom_call.1} parent=47 // pred_check
          %p307 = pneg %p47
        $region50: #{tpu_custom_call.1} parent=47 // pred_check_branch
          %309 = sbr.rel (%p307) target = $region52
        $region51: #{tpu_custom_call.1} parent=47 // pred_region
          %310 = dma.done %s303, 2048
        $region52: #{tpu_custom_call.1} parent=47 // pred_fallthru
          _
        // Predicated region
        $region53: #{tpu_custom_call.1} parent=47 // pred_check
          %p311 = pneg %p68
        $region54: #{tpu_custom_call.1} parent=47 // pred_check_branch
          %313 = sbr.rel (%p311) target = $region56
        $region55: #{tpu_custom_call.1} parent=47 // pred_region
          %314 = dma.done [#allocation6], 2048
        $region56: #{tpu_custom_call.1} parent=47 // pred_fallthru
          _
        // Predicated region
        $region57: #{tpu_custom_call.1} parent=47 // pred_check
          %p315 = pneg %p110
        $region58: #{tpu_custom_call.1} parent=47 // pred_check_branch
          %317 = sbr.rel (%p315) target = $region60
        $region59: #{tpu_custom_call.1} parent=47 // pred_region
          %318 = dma.done [#allocation6], 1024
        $region60: #{tpu_custom_call.1} parent=47 // pred_fallthru
          _
        // Predicated region
        $region61: #{tpu_custom_call.1} parent=47 // pred_check
          %p319 = pneg %p152
        $region62: #{tpu_custom_call.1} parent=47 // pred_check_branch
          %321 = sbr.rel (%p319) target = $region64
        $region63: #{tpu_custom_call.1} parent=47 // pred_region
          %322 = dma.done [#allocation9], 1024
        $region64: #{tpu_custom_call.1} parent=47 // pred_fallthru
          _
        %s323 = sand.u32 %s34, 1
        %s324 = scalar_lea.sflag [#allocation3], %s323
        %s325 = sand.u32 %s34, 1
        %s326 = smul.addr %s325, 128
        %s327 = scalar_lea.vmem [#allocation2], %s326
        %p328 = pneg %p47
        %p329 = pneg %p44
        %p330 = pneg %p68
        %p331 = pneg %p65
        %p332 = pneg %p89
        %p333 = pneg %p86
        %p334 = pneg %p110
        %p335 = pneg %p107
        %p336 = pneg %p131
        %p337 = pneg %p128
        %p338 = pneg %p152
        %p339 = pneg %p149
        %p340 = pneg %p173
        %p341 = pneg %p170
        %p342 = pneg %p199
        %p343 = pneg %p196
        %s344 = sand.u32 %s186, 1
        %s345 = scalar_lea.sflag [#allocation4], %s344
        %s346 = sand.u32 %s186, 1
        %s347 = smul.addr %s346, 64
        %s348 = scalar_lea.vmem [#allocation10], %s347
        %s349 = smul.u32 8, %s26
        %s350 = ssub.s32 25, %s349
        %p351 = scmp.lt.s32.totalorder %s350, 8
        %s352 = scalar_select %p351, %s350, 8
        %s353 = smul.u32 128, %s352
        %s354 = smul.u32 %s353, 2
        %s355 = smul.u32 8, %s26
        %s356 = ssub.s32 25, %s355
        %p357 = scmp.lt.s32.totalorder %s356, 8
        %s358 = scalar_select %p357, %s356, 8
        %s359 = smul.u32 128, %s358
        %v361 = vld [vmem:[%s306] sm:$0xff]
        %v362 = vld [vmem:[%s306 + $0x8] sm:$0xff]
        %v363 = vld [vmem:[%s306 + $0x10] sm:$0xff]
        %v364 = vld [vmem:[%s306 + $0x18] sm:$0xff]
        %v365 = vld [vmem:[%s306 + $0x20] sm:$0xff]
        %v366 = vld [vmem:[%s306 + $0x28] sm:$0xff]
        %v367 = vld [vmem:[%s306 + $0x30] sm:$0xff]
        %v368 = vld [vmem:[%s306 + $0x38] sm:$0xff]
        %v369 = vld [vmem:[%s306 + $0x40] sm:$0xff]
        %v370 = vld [vmem:[%s306 + $0x48] sm:$0xff]
        %v371 = vld [vmem:[%s306 + $0x50] sm:$0xff]
        %v372 = vld [vmem:[%s306 + $0x58] sm:$0xff]
        %v373 = vld [vmem:[%s306 + $0x60] sm:$0xff]
        %v374 = vld [vmem:[%s306 + $0x68] sm:$0xff]
        %v375 = vld [vmem:[%s306 + $0x70] sm:$0xff]
        %v376 = vld [vmem:[%s306 + $0x78] sm:$0xff]
        %v377 = vpack.c.bf16 %v363, %v361
        %v378 = vpack.c.bf16 %v364, %v362
        %v379 = vpack.c.bf16 %v367, %v365
        %v380 = vpack.c.bf16 %v368, %v366
        %v381 = vpack.c.bf16 %v371, %v369
        %v382 = vpack.c.bf16 %v372, %v370
        %v383 = vpack.c.bf16 %v375, %v373
        %v384 = vpack.c.bf16 %v376, %v374
        %v385 = vld [vmem:[#allocation5] sm:$0xf]
        %v386 = vld [vmem:[#allocation5 + $0x4] sm:$0xf]
        %v387 = vld [vmem:[#allocation5 + $0x8] sm:$0xf]
        %v388 = vld [vmem:[#allocation5 + $0xc] sm:$0xf]
        %v389 = vld [vmem:[#allocation5 + $0x10] sm:$0xf]
        %v390 = vld [vmem:[#allocation5 + $0x14] sm:$0xf]
        %v391 = vld [vmem:[#allocation5 + $0x18] sm:$0xf]
        %v392 = vld [vmem:[#allocation5 + $0x1c] sm:$0xf]
        %v393 = vld [vmem:[#allocation5 + $0x20] sm:$0xf]
        %v394 = vld [vmem:[#allocation5 + $0x24] sm:$0xf]
        %v395 = vld [vmem:[#allocation5 + $0x28] sm:$0xf]
        %v396 = vld [vmem:[#allocation5 + $0x2c] sm:$0xf]
        %v397 = vld [vmem:[#allocation5 + $0x30] sm:$0xf]
        %v398 = vld [vmem:[#allocation5 + $0x34] sm:$0xf]
        %v399 = vld [vmem:[#allocation5 + $0x38] sm:$0xf]
        %v400 = vld [vmem:[#allocation5 + $0x3c] sm:$0xf]
        %v401 = vld [vmem:[#allocation5 + $0x40] sm:$0xf]
        %v402 = vld [vmem:[#allocation5 + $0x44] sm:$0xf]
        %v403 = vld [vmem:[#allocation5 + $0x48] sm:$0xf]
        %v404 = vld [vmem:[#allocation5 + $0x4c] sm:$0xf]
        %v405 = vld [vmem:[#allocation5 + $0x50] sm:$0xf]
        %v406 = vld [vmem:[#allocation5 + $0x54] sm:$0xf]
        %v407 = vld [vmem:[#allocation5 + $0x58] sm:$0xf]
        %v408 = vld [vmem:[#allocation5 + $0x5c] sm:$0xf]
        %v409 = vld [vmem:[#allocation5 + $0x60] sm:$0xf]
        %v410 = vld [vmem:[#allocation5 + $0x64] sm:$0xf]
        %v411 = vld [vmem:[#allocation5 + $0x68] sm:$0xf]
        %v412 = vld [vmem:[#allocation5 + $0x6c] sm:$0xf]
        %v413 = vld [vmem:[#allocation5 + $0x70] sm:$0xf]
        %v414 = vld [vmem:[#allocation5 + $0x74] sm:$0xf]
        %v415 = vld [vmem:[#allocation5 + $0x78] sm:$0xf]
        %v416 = vld [vmem:[#allocation5 + $0x7c] sm:$0xf]
        %v417 = vld [vmem:[%s2] sm:$0x1]
        %v419 = vlaneseq
        %v420 = vshrl.u32 %v419, 7
        %v421 = vsub.s32 0, %v420
        %v422 = vrot.slane %v417, %v421
        %v456 = vunpack.c.l.b16 %v385
        %v457 = vunpack.c.l.b16 %v386
        %v458 = vunpack.c.l.b16 %v387
        %v459 = vunpack.c.l.b16 %v388
        %v460 = vunpack.c.l.b16 %v389
        %v461 = vunpack.c.l.b16 %v390
        %v462 = vunpack.c.l.b16 %v391
        %v463 = vunpack.c.l.b16 %v392
        %v464 = vunpack.c.l.b16 %v393
        %v465 = vunpack.c.l.b16 %v394
        %v466 = vunpack.c.l.b16 %v395
        %v467 = vunpack.c.l.b16 %v396
        %v468 = vunpack.c.l.b16 %v397
        %v469 = vunpack.c.l.b16 %v398
        %v470 = vunpack.c.l.b16 %v399
        %v471 = vunpack.c.l.b16 %v400
        %v472 = vunpack.c.l.b16 %v401
        %v473 = vunpack.c.l.b16 %v402
        %v474 = vunpack.c.l.b16 %v403
        %v475 = vunpack.c.l.b16 %v404
        %v476 = vunpack.c.l.b16 %v405
        %v477 = vunpack.c.l.b16 %v406
        %v478 = vunpack.c.l.b16 %v407
        %v479 = vunpack.c.l.b16 %v408
        %v480 = vunpack.c.l.b16 %v409
        %v481 = vunpack.c.l.b16 %v410
        %v482 = vunpack.c.l.b16 %v411
        %v483 = vunpack.c.l.b16 %v412
        %v484 = vunpack.c.l.b16 %v413
        %v485 = vunpack.c.l.b16 %v414
        %v486 = vunpack.c.l.b16 %v415
        %v487 = vunpack.c.l.b16 %v416
        %v488 = vpack.c.b16 %v457, %v456
        %v489 = vpack.c.b16 %v459, %v458
        %v490 = vpack.c.b16 %v461, %v460
        %v491 = vpack.c.b16 %v463, %v462
        %v492 = vpack.c.b16 %v465, %v464
        %v493 = vpack.c.b16 %v467, %v466
        %v494 = vpack.c.b16 %v469, %v468
        %v495 = vpack.c.b16 %v471, %v470
        %v496 = vpack.c.b16 %v473, %v472
        %v497 = vpack.c.b16 %v475, %v474
        %v498 = vpack.c.b16 %v477, %v476
        %v499 = vpack.c.b16 %v479, %v478
        %v500 = vpack.c.b16 %v481, %v480
        %v501 = vpack.c.b16 %v483, %v482
        %v502 = vpack.c.b16 %v485, %v484
        %v503 = vpack.c.b16 %v487, %v486
        %520 = vmatprep.subr.bf16.mxu0 0
        %521 = vmatpush1.bf16.msra.mxu0 %v495
        %522 = vmatprep.subr.bf16.mxu0 0
        %523 = vmatpush1.bf16.msra.mxu0 %v494
        %524 = vmatprep.subr.bf16.mxu0 0
        %525 = vmatpush1.bf16.msra.mxu0 %v493
        %526 = vmatprep.subr.bf16.mxu0 0
        %527 = vmatpush1.bf16.msra.mxu0 %v492
        %528 = vmatprep.subr.bf16.mxu0 0
        %529 = vmatpush1.bf16.msra.mxu0 %v491
        %530 = vmatprep.subr.bf16.mxu0 0
        %531 = vmatpush1.bf16.msra.mxu0 %v490
        %532 = vmatprep.subr.bf16.mxu0 0
        %533 = vmatpush1.bf16.msra.mxu0 %v489
        %534 = vmatprep.subr.bf16.mxu0 0
        %535 = vmatpush1.bf16.msra.mxu0 %v488
        %536 = vmatprep.subr.bf16.mxu0 0
        %537 = vmatpush2.bf16.msra.mxu0 %v503
        %538 = vmatprep.subr.bf16.mxu0 0
        %539 = vmatpush2.bf16.msra.mxu0 %v502
        %540 = vmatprep.subr.bf16.mxu0 0
        %541 = vmatpush2.bf16.msra.mxu0 %v501
        %542 = vmatprep.subr.bf16.mxu0 0
        %543 = vmatpush2.bf16.msra.mxu0 %v500
        %544 = vmatprep.subr.bf16.mxu0 0
        %545 = vmatpush2.bf16.msra.mxu0 %v499
        %546 = vmatprep.subr.bf16.mxu0 0
        %547 = vmatpush2.bf16.msra.mxu0 %v498
        %548 = vmatprep.subr.bf16.mxu0 0
        %549 = vmatpush2.bf16.msra.mxu0 %v497
        %550 = vmatprep.subr.bf16.mxu0 0
        %551 = vmatpush2.bf16.msra.mxu0 %v496
        %552 = vmatprep.mubr.bf16.mxu0 %v378
        %553 = vmatmul.mubr.bf16.gmra.mxu0 %v377
        %v554 = vpop.f32.mrf.mxu0
        %v555 = vadd.f32 %v422, %v554
        %v556 = vpop.f32.mrf.mxu0
        %v557 = vpop.f32.mrf.mxu0
        %v558 = vadd.f32 %v422, %v557
        %v559 = vpop.f32.mrf.mxu0
        %560 = vmatprep.mubr.bf16.mxu0 %v380
        %561 = vmatmul.mubr.bf16.gmra.mxu0 %v379
        %v562 = vpop.f32.mrf.mxu0
        %v563 = vadd.f32 %v422, %v562
        %v564 = vpop.f32.mrf.mxu0
        %v565 = vpop.f32.mrf.mxu0
        %v566 = vadd.f32 %v422, %v565
        %v567 = vpop.f32.mrf.mxu0
        %568 = vmatprep.mubr.bf16.mxu0 %v382
        %569 = vmatmul.mubr.bf16.gmra.mxu0 %v381
        %v570 = vpop.f32.mrf.mxu0
        %v571 = vadd.f32 %v422, %v570
        %v572 = vpop.f32.mrf.mxu0
        %v573 = vpop.f32.mrf.mxu0
        %v574 = vadd.f32 %v422, %v573
        %v575 = vpop.f32.mrf.mxu0
        %576 = vmatprep.mubr.bf16.mxu0 %v384
        %577 = vmatmul.mubr.bf16.gmra.mxu0 %v383
        %v578 = vpop.f32.mrf.mxu0
        %v579 = vadd.f32 %v422, %v578
        %v580 = vpop.f32.mrf.mxu0
        %v581 = vpop.f32.mrf.mxu0
        %v582 = vadd.f32 %v422, %v581
        %v583 = vpop.f32.mrf.mxu0
        %584 = vdwg.mxu0
        %v585 = vmax.f32 %v555, 0.0
        %v586 = vmax.f32 %v558, 0.0
        %v587 = vmax.f32 %v563, 0.0
        %v588 = vmax.f32 %v566, 0.0
        %v589 = vmax.f32 %v571, 0.0
        %v590 = vmax.f32 %v574, 0.0
        %v591 = vmax.f32 %v579, 0.0
        %v592 = vmax.f32 %v582, 0.0
        %v593 = vpack.c.bf16 %v586, %v585
        %v594 = vpack.c.bf16 %v588, %v587
        %v595 = vpack.c.bf16 %v590, %v589
        %v596 = vpack.c.bf16 %v592, %v591
        %v597 = vld [vmem:[#allocation7] sm:$0xf]
        %v598 = vld [vmem:[#allocation7 + $0x4] sm:$0xf]
        %v599 = vld [vmem:[#allocation7 + $0x8] sm:$0xf]
        %v600 = vld [vmem:[#allocation7 + $0xc] sm:$0xf]
        %v601 = vld [vmem:[#allocation7 + $0x10] sm:$0xf]
        %v602 = vld [vmem:[#allocation7 + $0x14] sm:$0xf]
        %v603 = vld [vmem:[#allocation7 + $0x18] sm:$0xf]
        %v604 = vld [vmem:[#allocation7 + $0x1c] sm:$0xf]
        %v605 = vld [vmem:[#allocation7 + $0x20] sm:$0xf]
        %v606 = vld [vmem:[#allocation7 + $0x24] sm:$0xf]
        %v607 = vld [vmem:[#allocation7 + $0x28] sm:$0xf]
        %v608 = vld [vmem:[#allocation7 + $0x2c] sm:$0xf]
        %v609 = vld [vmem:[#allocation7 + $0x30] sm:$0xf]
        %v610 = vld [vmem:[#allocation7 + $0x34] sm:$0xf]
        %v611 = vld [vmem:[#allocation7 + $0x38] sm:$0xf]
        %v612 = vld [vmem:[#allocation7 + $0x3c] sm:$0xf]
        %v613 = vld [vmem:[%s4] sm:$0x1]
        %v615 = vlaneseq
        %v616 = vshrl.u32 %v615, 7
        %v617 = vsub.s32 0, %v616
        %v618 = vrot.slane %v613, %v617
        %v636 = vunpack.c.l.b16 %v597
        %v637 = vunpack.c.l.b16 %v598
        %v638 = vunpack.c.l.b16 %v599
        %v639 = vunpack.c.l.b16 %v600
        %v640 = vunpack.c.l.b16 %v601
        %v641 = vunpack.c.l.b16 %v602
        %v642 = vunpack.c.l.b16 %v603
        %v643 = vunpack.c.l.b16 %v604
        %v644 = vunpack.c.l.b16 %v605
        %v645 = vunpack.c.l.b16 %v606
        %v646 = vunpack.c.l.b16 %v607
        %v647 = vunpack.c.l.b16 %v608
        %v648 = vunpack.c.l.b16 %v609
        %v649 = vunpack.c.l.b16 %v610
        %v650 = vunpack.c.l.b16 %v611
        %v651 = vunpack.c.l.b16 %v612
        %v652 = vpack.c.b16 %v637, %v636
        %v653 = vpack.c.b16 %v639, %v638
        %v654 = vpack.c.b16 %v641, %v640
        %v655 = vpack.c.b16 %v643, %v642
        %v656 = vpack.c.b16 %v645, %v644
        %v657 = vpack.c.b16 %v647, %v646
        %v658 = vpack.c.b16 %v649, %v648
        %v659 = vpack.c.b16 %v651, %v650
        %668 = vmatprep.subr.bf16.mxu0 0
        %669 = vmatpush1.bf16.msra.mxu0 %v659
        %670 = vmatprep.subr.bf16.mxu0 0
        %671 = vmatpush1.bf16.msra.mxu0 %v658
        %672 = vmatprep.subr.bf16.mxu0 0
        %673 = vmatpush1.bf16.msra.mxu0 %v657
        %674 = vmatprep.subr.bf16.mxu0 0
        %675 = vmatpush1.bf16.msra.mxu0 %v656
        %676 = vmatprep.subr.bf16.mxu0 0
        %677 = vmatpush1.bf16.msra.mxu0 %v655
        %678 = vmatprep.subr.bf16.mxu0 0
        %679 = vmatpush1.bf16.msra.mxu0 %v654
        %680 = vmatprep.subr.bf16.mxu0 0
        %681 = vmatpush1.bf16.msra.mxu0 %v653
        %682 = vmatprep.subr.bf16.mxu0 0
        %683 = vmatpush1.bf16.msra.mxu0 %v652
        %684 = vmatprep.subr.bf16.mxu0 0
        %685 = vmatpush2.bf16.msra.mxu0 0
        %686 = vmatprep.subr.bf16.mxu0 0
        %687 = vmatpush2.bf16.msra.mxu0 0
        %688 = vmatprep.subr.bf16.mxu0 0
        %689 = vmatpush2.bf16.msra.mxu0 0
        %690 = vmatprep.subr.bf16.mxu0 0
        %691 = vmatpush2.bf16.msra.mxu0 0
        %692 = vmatprep.subr.bf16.mxu0 0
        %693 = vmatpush2.bf16.msra.mxu0 0
        %694 = vmatprep.subr.bf16.mxu0 0
        %695 = vmatpush2.bf16.msra.mxu0 0
        %696 = vmatprep.subr.bf16.mxu0 0
        %697 = vmatpush2.bf16.msra.mxu0 0
        %698 = vmatprep.subr.bf16.mxu0 0
        %699 = vmatpush2.bf16.msra.mxu0 0
        %700 = vmatprep.mubr.bf16.mxu0 0
        %701 = vmatmul.mubr.bf16.gmra.mxu0 %v593
        %v702 = vpop.f32.mrf.mxu0
        %v703 = vadd.f32 %v618, %v702
        %v704 = vpop.f32.mrf.mxu0
        %v705 = vpop.f32.mrf.mxu0
        %v706 = vadd.f32 %v618, %v705
        %v707 = vpop.f32.mrf.mxu0
        %708 = vmatprep.mubr.bf16.mxu0 0
        %709 = vmatmul.mubr.bf16.gmra.mxu0 %v594
        %v710 = vpop.f32.mrf.mxu0
        %v711 = vadd.f32 %v618, %v710
        %v712 = vpop.f32.mrf.mxu0
        %v713 = vpop.f32.mrf.mxu0
        %v714 = vadd.f32 %v618, %v713
        %v715 = vpop.f32.mrf.mxu0
        %716 = vmatprep.mubr.bf16.mxu0 0
        %717 = vmatmul.mubr.bf16.gmra.mxu0 %v595
        %v718 = vpop.f32.mrf.mxu0
        %v719 = vadd.f32 %v618, %v718
        %v720 = vpop.f32.mrf.mxu0
        %v721 = vpop.f32.mrf.mxu0
        %v722 = vadd.f32 %v618, %v721
        %v723 = vpop.f32.mrf.mxu0
        %724 = vmatprep.mubr.bf16.mxu0 0
        %725 = vmatmul.mubr.bf16.gmra.mxu0 %v596
        %v726 = vpop.f32.mrf.mxu0
        %v727 = vadd.f32 %v618, %v726
        %v728 = vpop.f32.mrf.mxu0
        %v729 = vpop.f32.mrf.mxu0
        %v730 = vadd.f32 %v618, %v729
        %v731 = vpop.f32.mrf.mxu0
        %732 = vdwg.mxu0
        %v733 = vmax.f32 %v703, 0.0
        %v734 = vmax.f32 %v706, 0.0
        %v735 = vmax.f32 %v711, 0.0
        %v736 = vmax.f32 %v714, 0.0
        %v737 = vmax.f32 %v719, 0.0
        %v738 = vmax.f32 %v722, 0.0
        %v739 = vmax.f32 %v727, 0.0
        %v740 = vmax.f32 %v730, 0.0
        %v741 = vpack.c.bf16 %v734, %v733
        %v742 = vpack.c.bf16 %v736, %v735
        %v743 = vpack.c.bf16 %v738, %v737
        %v744 = vpack.c.bf16 %v740, %v739
        %v745 = vld [vmem:[#allocation8] sm:$0xf]
        %v746 = vld [vmem:[#allocation8 + $0x4] sm:$0xf]
        %v747 = vld [vmem:[#allocation8 + $0x8] sm:$0xf]
        %v748 = vld [vmem:[#allocation8 + $0xc] sm:$0xf]
        %v749 = vld [vmem:[#allocation8 + $0x10] sm:$0xf]
        %v750 = vld [vmem:[#allocation8 + $0x14] sm:$0xf]
        %v751 = vld [vmem:[#allocation8 + $0x18] sm:$0xf]
        %v752 = vld [vmem:[#allocation8 + $0x1c] sm:$0xf]
        %v753 = vld [vmem:[#allocation8 + $0x20] sm:$0xf]
        %v754 = vld [vmem:[#allocation8 + $0x24] sm:$0xf]
        %v755 = vld [vmem:[#allocation8 + $0x28] sm:$0xf]
        %v756 = vld [vmem:[#allocation8 + $0x2c] sm:$0xf]
        %v757 = vld [vmem:[#allocation8 + $0x30] sm:$0xf]
        %v758 = vld [vmem:[#allocation8 + $0x34] sm:$0xf]
        %v759 = vld [vmem:[#allocation8 + $0x38] sm:$0xf]
        %v760 = vld [vmem:[#allocation8 + $0x3c] sm:$0xf]
        %v761 = vld [vmem:[%s6] sm:$0x1]
        %v763 = vlaneseq
        %v764 = vshrl.u32 %v763, 7
        %v765 = vsub.s32 0, %v764
        %v766 = vrot.slane %v761, %v765
        %v784 = vunpack.c.l.b16 %v745
        %v785 = vunpack.c.l.b16 %v746
        %v786 = vunpack.c.l.b16 %v747
        %v787 = vunpack.c.l.b16 %v748
        %v788 = vunpack.c.l.b16 %v749
        %v789 = vunpack.c.l.b16 %v750
        %v790 = vunpack.c.l.b16 %v751
        %v791 = vunpack.c.l.b16 %v752
        %v792 = vunpack.c.l.b16 %v753
        %v793 = vunpack.c.l.b16 %v754
        %v794 = vunpack.c.l.b16 %v755
        %v795 = vunpack.c.l.b16 %v756
        %v796 = vunpack.c.l.b16 %v757
        %v797 = vunpack.c.l.b16 %v758
        %v798 = vunpack.c.l.b16 %v759
        %v799 = vunpack.c.l.b16 %v760
        %v800 = vpack.c.b16 %v785, %v784
        %v801 = vpack.c.b16 %v787, %v786
        %v802 = vpack.c.b16 %v789, %v788
        %v803 = vpack.c.b16 %v791, %v790
        %v804 = vpack.c.b16 %v793, %v792
        %v805 = vpack.c.b16 %v795, %v794
        %v806 = vpack.c.b16 %v797, %v796
        %v807 = vpack.c.b16 %v799, %v798
        %816 = vmatprep.subr.bf16.mxu0 0
        %817 = vmatpush1.bf16.msra.mxu0 %v807
        %818 = vmatprep.subr.bf16.mxu0 0
        %819 = vmatpush1.bf16.msra.mxu0 %v806
        %820 = vmatprep.subr.bf16.mxu0 0
        %821 = vmatpush1.bf16.msra.mxu0 %v805
        %822 = vmatprep.subr.bf16.mxu0 0
        %823 = vmatpush1.bf16.msra.mxu0 %v804
        %824 = vmatprep.subr.bf16.mxu0 0
        %825 = vmatpush1.bf16.msra.mxu0 %v803
        %826 = vmatprep.subr.bf16.mxu0 0
        %827 = vmatpush1.bf16.msra.mxu0 %v802
        %828 = vmatprep.subr.bf16.mxu0 0
        %829 = vmatpush1.bf16.msra.mxu0 %v801
        %830 = vmatprep.subr.bf16.mxu0 0
        %831 = vmatpush1.bf16.msra.mxu0 %v800
        %832 = vmatprep.subr.bf16.mxu0 0
        %833 = vmatpush2.bf16.msra.mxu0 0
        %834 = vmatprep.subr.bf16.mxu0 0
        %835 = vmatpush2.bf16.msra.mxu0 0
        %836 = vmatprep.subr.bf16.mxu0 0
        %837 = vmatpush2.bf16.msra.mxu0 0
        %838 = vmatprep.subr.bf16.mxu0 0
        %839 = vmatpush2.bf16.msra.mxu0 0
        %840 = vmatprep.subr.bf16.mxu0 0
        %841 = vmatpush2.bf16.msra.mxu0 0
        %842 = vmatprep.subr.bf16.mxu0 0
        %843 = vmatpush2.bf16.msra.mxu0 0
        %844 = vmatprep.subr.bf16.mxu0 0
        %845 = vmatpush2.bf16.msra.mxu0 0
        %846 = vmatprep.subr.bf16.mxu0 0
        %847 = vmatpush2.bf16.msra.mxu0 0
        %848 = vmatprep.mubr.bf16.mxu0 0
        %849 = vmatmul.mubr.bf16.gmra.mxu0 %v741
        %v850 = vpop.f32.mrf.mxu0
        %v851 = vadd.f32 %v766, %v850
        %v852 = vpop.f32.mrf.mxu0
        %v853 = vpop.f32.mrf.mxu0
        %v854 = vadd.f32 %v766, %v853
        %v855 = vpop.f32.mrf.mxu0
        %856 = vmatprep.mubr.bf16.mxu0 0
        %857 = vmatmul.mubr.bf16.gmra.mxu0 %v742
        %v858 = vpop.f32.mrf.mxu0
        %v859 = vadd.f32 %v766, %v858
        %v860 = vpop.f32.mrf.mxu0
        %v861 = vpop.f32.mrf.mxu0
        %v862 = vadd.f32 %v766, %v861
        %v863 = vpop.f32.mrf.mxu0
        %864 = vmatprep.mubr.bf16.mxu0 0
        %865 = vmatmul.mubr.bf16.gmra.mxu0 %v743
        %v866 = vpop.f32.mrf.mxu0
        %v867 = vadd.f32 %v766, %v866
        %v868 = vpop.f32.mrf.mxu0
        %v869 = vpop.f32.mrf.mxu0
        %v870 = vadd.f32 %v766, %v869
        %v871 = vpop.f32.mrf.mxu0
        %872 = vmatprep.mubr.bf16.mxu0 0
        %873 = vmatmul.mubr.bf16.gmra.mxu0 %v744
        %v874 = vpop.f32.mrf.mxu0
        %v875 = vadd.f32 %v766, %v874
        %v876 = vpop.f32.mrf.mxu0
        %v877 = vpop.f32.mrf.mxu0
        %v878 = vadd.f32 %v766, %v877
        %v879 = vpop.f32.mrf.mxu0
        %880 = vdwg.mxu0
        %881 = vst [vmem:[%s348] sm:$0xff] %v851
        %882 = vst [vmem:[%s348 + $0x8] sm:$0xff] %v854
        %883 = vst [vmem:[%s348 + $0x10] sm:$0xff] %v859
        %884 = vst [vmem:[%s348 + $0x18] sm:$0xff] %v862
        %885 = vst [vmem:[%s348 + $0x20] sm:$0xff] %v867
        %886 = vst [vmem:[%s348 + $0x28] sm:$0xff] %v870
        %887 = vst [vmem:[%s348 + $0x30] sm:$0xff] %v875
        %888 = vst [vmem:[%s348 + $0x38] sm:$0xff] %v878
        %s889 = sand.u32 %s186, 1
        %s890 = scalar_lea.sflag [#allocation4], %s889
        %s891 = sand.u32 %s186, 1
        %s892 = smul.addr %s891, 64
        %s893 = scalar_lea.vmem [#allocation10], %s892
        // Predicated region
        $region65: #{tpu_custom_call.1} parent=47 // pred_check
          %p894 = pneg %p196
        $region66: #{tpu_custom_call.1} parent=47 // pred_check_branch
          %896 = sbr.rel (%p894) target = $region68
        $region67: #{tpu_custom_call.1} parent=47 // pred_region
          %s897 = smul.u32 8, %s26
          %s898 = ssub.s32 25, %s897
          %p899 = scmp.lt.s32.totalorder %s898, 8
          %s900 = scalar_select %p899, %s898, 8
          %s901 = smul.u32 128, %s900
          %s903 = ssub.s32 1024, %s901
          %904 = vsyncadd %s890, %s903
          %p905 = scmp.ne.s32.totalorder 0, %s901
          %s906 = smul.addr %s897, 128
          %s907 = scalar_lea.hbm %s7, %s906
          %s908 = smul.u32 8, %s900
          %s909 = sshll.u32 %s893, 4
          %s910 = int_to_ptr.vmem [resolvable:$true] %s909
          %s911 = sshll.u32 %s908, 4
          %915 = dma.vmem_to_hbm [thread:$0]  (%p905), %s910, %s911, %s907, %s890, 128, 128, 8
        $region68: #{tpu_custom_call.1} parent=47 // pred_fallthru
          _
      $region48: #{tpu_custom_call.1} parent=5 // pred_fallthru
        _
      %p916 = scmp.le.s32.totalorder 2, %s21
      // Predicated region
      $region69: #{tpu_custom_call.1} parent=5 // pred_check
        %p917 = pneg %p916
      $region70: #{tpu_custom_call.1} parent=5 // pred_check_branch
        %919 = sbr.rel (%p917) target = $region72
      $region71: #{tpu_custom_call.1} parent=5 // pred_region
        %s920 = ssub.s32 %s21, 2
        // Predicated region
        $region73: #{tpu_custom_call.1} parent=71 // pred_check
          %p921 = pneg %p202
        $region74: #{tpu_custom_call.1} parent=71 // pred_check_branch
          %923 = sbr.rel (%p921) target = $region76
        $region75: #{tpu_custom_call.1} parent=71 // pred_region
          %s924 = sand.u32 %s187, 1
          %s925 = scalar_lea.sflag [#allocation4], %s924
          %s926 = sand.u32 %s187, 1
          %s927 = smul.addr %s926, 64
          %s928 = scalar_lea.vmem [#allocation10], %s927
          %929 = dma.done %s925, 1024
        $region76: #{tpu_custom_call.1} parent=71 // pred_fallthru
          _
      $region72: #{tpu_custom_call.1} parent=5 // pred_fallthru
        _
    $region6: #{tpu_custom_call.1} parent=1 // loop_footer
      %s25 = sadd.s32 1, %s21
    $region7: #{tpu_custom_call.1} parent=1 // loop_footer_branch
      %20 = sbr.rel target = $region3
    $region8: #{tpu_custom_call.1} parent=1 // loop_exit
      _
    %930 = vsyncpa [#allocation3], 1
    %s931 = scalar_lea.sflag [#allocation3], 1
    %932 = vsyncpa %s931, 1
    %933 = vsyncpa [#allocation6], 1
    %934 = vsyncpa [#allocation9], 1
    %935 = vsyncpa [#allocation4], 1
    %s936 = scalar_lea.sflag [#allocation4], 1
    %937 = vsyncpa %s936, 1

</llo_original>
